<compile_context>
chip_gen: v7x
topology: tpu7x:2x2x1
jax: 0.10.0
libtpu: 0.0.40
codegen_flags: <defaults>
</compile_context>

<pallas_src>
import functools

import jax
import jax.numpy as jnp
import numpy as np
from jax.experimental import pallas as pl
from jax.experimental.pallas import tpu as pltpu


def _round_up(n, m):
    return ((n + m - 1) // m) * m


def _cdiv(a, b):
    return (a + b - 1) // b


# ----------------------------------------------------------------------------
# Pallas kernel: fused 3-layer MLP in transposed (feature-major) layout.
# Shapes inside one grid step (tn = batch tile, lane-dense on the 128-lane axis):
#   x_ref  (D, tn)   w1_ref (H1, D)   b1_ref (H1, 1)
#   h1     (H1, tn)  w2_ref (H2, H1)  b2_ref (H2, 1)
#   h2     (H2, tn)  w3_ref (O, H2)   b3_ref (O, 1)
#   o_ref  (O, tn)
# ----------------------------------------------------------------------------
def _pdn_kernel(x_ref, w1_ref, b1_ref, w2_ref, b2_ref, w3_ref, b3_ref, o_ref):
    xt = x_ref[...]                                                   # (D, tn)

    h1 = jnp.dot(w1_ref[...], xt, preferred_element_type=jnp.float32) + b1_ref[...]
    h1 = jnp.maximum(h1, 0.0)                                         # (H1, tn)

    h2 = jnp.dot(w2_ref[...], h1, preferred_element_type=jnp.float32) + b2_ref[...]
    h2 = jnp.maximum(h2, 0.0)                                         # (H2, tn)

    o_ref[...] = (jnp.dot(w3_ref[...], h2, preferred_element_type=jnp.float32)
                  + b3_ref[...]).astype(o_ref.dtype)                  # (O, tn)


def _choose_tiling(n, tile_n):
    """Pick (tile, padded_n).  tile is a multiple of 128, the grid has >= 2 steps
    whenever there is more than one 128-row block of work (keeps both v7x
    TensorCores busy), and padding waste is bounded by ~grid_steps * 128 rows."""
    assert tile_n >= 128 and tile_n % 128 == 0, "tile_n must be a multiple of 128"
    n128 = _round_up(max(n, 1), 128)
    if n128 <= 128:
        return 128, 128
    g = max(2, _cdiv(n128, tile_n))
    tile = _round_up(_cdiv(n128, g), 128)
    g = _cdiv(n128, tile)
    return tile, g * tile


def _forward_feature_major(xt, folded, tile):
    """Zero-layout-pass entry: xt is (D, M) feature-major with M % tile == 0.
    Only xt and the (O, M) output stream HBM; the (tiny) weights stay
    VMEM-resident via constant index_maps.  Returns (output_dim, M)."""
    d, m = xt.shape
    assert m % tile == 0 and tile % 128 == 0
    out_dim = folded["w3t"].shape[0]
    weights = [folded[k] for k in ("w1t", "b1t", "w2t", "b2t", "w3t", "b3t")]

    def full_spec(arr):
        nd = arr.ndim
        return pl.BlockSpec(arr.shape, lambda i, _nd=nd: (0,) * _nd)

    return pl.pallas_call(
        _pdn_kernel,
        out_shape=jax.ShapeDtypeStruct((out_dim, m), jnp.float32),
        grid_spec=pl.GridSpec(
            grid=(m // tile,),
            in_specs=[pl.BlockSpec((d, tile), lambda i: (0, i))]
                     + [full_spec(w) for w in weights],
            out_specs=pl.BlockSpec((out_dim, tile), lambda i: (0, i)),
        ),
        compiler_params=pltpu.CompilerParams(
            dimension_semantics=("parallel",),
            # ~290-500 B of VMEM per batch row (double-buffered x/out tiles plus
            # h1/h2 temps): 48 MiB covers the 32K-row default tile with ample
            # headroom, lifts v5e's 16 MiB default scoped limit, and stays well
            # under v7x's 64 MiB physical VMEM.
            vmem_limit_bytes=48 * 1024 * 1024,
        ),
    )(xt, *weights)


def pairwise_difference_net_feature_major(xt, folded, *, tile_n=32768):
    """Feature-major forward: xt is (D, M), batch on the minor (lane) axis,
    M a multiple of 128; returns (output_dim, M).  Use this when the surrounding
    model keeps activations feature-major - no wrapper layout passes at all."""
    m = xt.shape[1]
    assert m % 128 == 0, "feature-major batch axis must be a multiple of 128"
    units, cap = m // 128, max(1, tile_n // 128)
    t = min(units if units == 1 else max(1, units // 2), cap)   # >=2 steps when possible
    while units % t:
        t -= 1
    return _forward_feature_major(xt, folded, 128 * t)


@functools.partial(jax.jit, static_argnums=(2, 3))
def _forward_natural(x, folded, tile, n_pad):
    n, d = x.shape
    # Layout plumbing: under jit the pad+transpose fuses into one HBM pass each
    # way.  Batch goes on the 128-lane axis, zero-padded to the tile grid.
    xt = jnp.zeros((d, n_pad), jnp.float32).at[:, :n].set(x.astype(jnp.float32).T)
    out_t = _forward_feature_major(xt, folded, tile)
    return out_t[:, :n].T


def pairwise_difference_net(x, folded, *, tile_n=32768):
    """Natural-layout fused forward pass. x: (N, D) float32 -> (N, output_dim)."""
    n = x.shape[0]
    tile, n_pad = _choose_tiling(n, tile_n)
    return _forward_natural(x, folded, tile, n_pad)


# ----------------------------------------------------------------------------
# Parameter construction (deterministic, in-script)
# ----------------------------------------------------------------------------
def make_pairwise_projection(input_dim):
    """A: (D, P) with P = D + D*(D-1)//2.  First D columns = identity, then one
    column per pair (i, j), i < j, with +1 at row i and -1 at row j."""
    D = input_dim
    P = D + D * (D - 1) // 2
    A = np.zeros((D, P), dtype=np.float32)
    A[:, :D] = np.eye(D, dtype=np.float32)
    col = D
    for i in range(D):
        for j in range(i + 1, D):
            A[i, col] = 1.0
            A[j, col] = -1.0
            col += 1
    return jnp.asarray(A)


def init_params(key, input_dim, output_dim, hidden_dims=(32, 16), eps=1e-5):
    P = input_dim + input_dim * (input_dim - 1) // 2
    dims = [P] + list(hidden_dims)
    params = {"A": make_pairwise_projection(input_dim)}
    keys = jax.random.split(key, 16)
    ki = 0

    def linear(kw, kb, fan_in, fan_out):
        # PyTorch nn.Linear default init: U(-1/sqrt(fan_in), 1/sqrt(fan_in)).
        bound = 1.0 / np.sqrt(fan_in)
        w = jax.random.uniform(kw, (fan_in, fan_out), jnp.float32, -bound, bound)
        b = jax.random.uniform(kb, (1, fan_out), jnp.float32, -bound, bound)
        return w, b

    for li, (din, dout) in enumerate(zip(dims[:-1], dims[1:]), start=1):
        w, b = linear(keys[ki], keys[ki + 1], din, dout)
        ki += 2
        # BatchNorm1d (eval) folded to per-feature scale/shift: y = h*scale + shift
        gamma = 1.0 + 0.1 * jax.random.normal(keys[ki], (1, dout), jnp.float32)
        beta = 0.1 * jax.random.normal(keys[ki + 1], (1, dout), jnp.float32)
        ki += 2
        run_mean = 0.05 * jax.random.normal(keys[ki], (1, dout), jnp.float32)
        run_var = jnp.abs(1.0 + 0.1 * jax.random.normal(keys[ki + 1], (1, dout),
                                                        jnp.float32))
        ki += 2
        scale = gamma / jnp.sqrt(run_var + eps)
        shift = beta - run_mean * scale
        params[f"w{li}"] = w
        params[f"b{li}"] = b
        params[f"s{li}"] = scale
        params[f"t{li}"] = shift

    w3, b3 = linear(keys[ki], keys[ki + 1], dims[-1], output_dim)
    params["w3"] = w3
    params["b3"] = b3
    return params


def fold_params(p):
    """Exact algebraic folds (done once, outside the kernel):
    - pairwise projection A folded into Linear-1:  w1' = A @ w1
    - eval-BatchNorm k folded into Linear k+1:     w' = diag(s) @ w, b' = b + t @ w
    then transposed to the (out_features, in_features) / column-bias layout the
    feature-major kernel uses."""
    w1f = p["A"] @ p["w1"]                       # (D, H1)
    b1f = p["b1"]                                # (1, H1)
    w2f = p["w2"] * p["s1"].T                    # (H1, H2)  rows scaled by s1
    b2f = p["b2"] + p["t1"] @ p["w2"]            # (1, H2)
    w3f = p["w3"] * p["s2"].T                    # (H2, O)
    b3f = p["b3"] + p["t2"] @ p["w3"]            # (1, O)
    return {"w1t": w1f.T, "b1t": b1f.T,
            "w2t": w2f.T, "b2t": b2f.T,
            "w3t": w3f.T, "b3t": b3f.T}


# ----------------------------------------------------------------------------
# Pure-JAX reference (mirrors the PyTorch eval-mode forward, unfolded params)
# ----------------------------------------------------------------------------
def reference_forward(x, p):
    z = x @ p["A"]
    h1 = jnp.maximum(z @ p["w1"] + p["b1"], 0.0) * p["s1"] + p["t1"]
    h2 = jnp.maximum(h1 @ p["w2"] + p["b2"], 0.0) * p["s2"] + p["t2"]
    return h2 @ p["w3"] + p["b3"]


if __name__ == "__main__":
    key = jax.random.PRNGKey(0)
    k_param, k_x, k_x2 = jax.random.split(key, 3)

    input_dim, output_dim = 8, 4
    hidden_dims = (32, 16)

    params = init_params(k_param, input_dim, output_dim, hidden_dims)
    folded = fold_params(params)

    # 1) Small single-tile case (whole padded batch in one grid step).
    x = jax.random.normal(k_x, (16, input_dim), dtype=jnp.float32)
    out = jax.block_until_ready(pairwise_difference_net(x, folded))
    ref = reference_forward(x, params)
    assert out.shape == (16, output_dim)
    np.testing.assert_allclose(np.asarray(out), np.asarray(ref),
                               rtol=1e-4, atol=1e-5)

    # 2) Non-multiple batch with the default adaptive tiling: 300 rows -> two
    #    256-row tiles (exercises padding, the >=2-step megacore grid and the
    #    lane-dense multi-tile path).
    x2 = jax.random.normal(k_x2, (300, input_dim), dtype=jnp.float32)
    out2 = jax.block_until_ready(pairwise_difference_net(x2, folded))
    ref2 = reference_forward(x2, params)
    assert out2.shape == (300, output_dim)
    np.testing.assert_allclose(np.asarray(out2), np.asarray(ref2),
                               rtol=1e-4, atol=1e-5)

    # 3) Explicitly small tile (128) -> 3 grid steps, same results.
    out3 = jax.block_until_ready(
        pairwise_difference_net(x2, folded, tile_n=128))
    np.testing.assert_allclose(np.asarray(out3), np.asarray(ref2),
                               rtol=1e-4, atol=1e-5)

    print("KERNEL_OK")
</pallas_src>

<mosaic_0001>
module attributes {stable_mosaic.version = 11 : i64} {
  func.func @_pdn_kernel(%arg0: i32, %arg1: memref<8x128xf32, #tpu.memory_space<vmem>>, %arg2: memref<32x8xf32, #tpu.memory_space<vmem>>, %arg3: memref<32x1xf32, #tpu.memory_space<vmem>>, %arg4: memref<16x32xf32, #tpu.memory_space<vmem>>, %arg5: memref<16x1xf32, #tpu.memory_space<vmem>>, %arg6: memref<4x16xf32, #tpu.memory_space<vmem>>, %arg7: memref<4x1xf32, #tpu.memory_space<vmem>>, %arg8: memref<4x128xf32, #tpu.memory_space<vmem>>) attributes {dimension_semantics = [#tpu.dimension_semantics<parallel>], iteration_bounds = array<i64: 1>, scalar_prefetch = 0 : i64, scratch_operands = 0 : i64, tpu.core_type = #tpu.core_type<tc>, window_params = [{transform_indices = @transform_0, window_bounds = array<i64: 8, 128>}, {pipeline_mode = #tpu.pipeline_mode<synchronous>, transform_indices = @transform_1, window_bounds = array<i64: 32, 8>}, {pipeline_mode = #tpu.pipeline_mode<synchronous>, transform_indices = @transform_2, window_bounds = array<i64: 32, 1>}, {pipeline_mode = #tpu.pipeline_mode<synchronous>, transform_indices = @transform_3, window_bounds = array<i64: 16, 32>}, {pipeline_mode = #tpu.pipeline_mode<synchronous>, transform_indices = @transform_4, window_bounds = array<i64: 16, 1>}, {pipeline_mode = #tpu.pipeline_mode<synchronous>, transform_indices = @transform_5, window_bounds = array<i64: 4, 16>}, {pipeline_mode = #tpu.pipeline_mode<synchronous>, transform_indices = @transform_6, window_bounds = array<i64: 4, 1>}, {transform_indices = @transform_7, window_bounds = array<i64: 4, 128>}]} {
    %c0 = arith.constant 0 : index
    %c0_0 = arith.constant 0 : index
    %0 = vector.load %arg1[%c0, %c0_0] : memref<8x128xf32, #tpu.memory_space<vmem>>, vector<8x128xf32>
    %c0_1 = arith.constant 0 : index
    %c0_2 = arith.constant 0 : index
    %1 = vector.load %arg2[%c0_1, %c0_2] : memref<32x8xf32, #tpu.memory_space<vmem>>, vector<32x8xf32>
    %cst = arith.constant dense<0.000000e+00> : vector<32x128xf32>
    %2 = tpu.matmul %1, %0, %cst {dimension_numbers = #tpu.dot_dimension_numbers<[1], [0], [0], [1], [0, 0, 1, 1], [], []>} : vector<32x8xf32>, vector<8x128xf32>, vector<32x128xf32> -> vector<32x128xf32>
    %c0_3 = arith.constant 0 : index
    %c0_4 = arith.constant 0 : index
    %3 = vector.load %arg3[%c0_3, %c0_4] : memref<32x1xf32, #tpu.memory_space<vmem>>, vector<32x1xf32>
    %4 = vector.broadcast %3 : vector<32x1xf32> to vector<32x128xf32>
    %5 = arith.addf %2, %4 : vector<32x128xf32>
    %cst_5 = arith.constant 0.000000e+00 : f32
    %6 = vector.broadcast %cst_5 : f32 to vector<32x128xf32>
    %7 = arith.maximumf %5, %6 : vector<32x128xf32>
    %c0_6 = arith.constant 0 : index
    %c0_7 = arith.constant 0 : index
    %8 = vector.load %arg4[%c0_6, %c0_7] : memref<16x32xf32, #tpu.memory_space<vmem>>, vector<16x32xf32>
    %cst_8 = arith.constant dense<0.000000e+00> : vector<16x128xf32>
    %9 = tpu.matmul %8, %7, %cst_8 {dimension_numbers = #tpu.dot_dimension_numbers<[1], [0], [0], [1], [0, 0, 1, 1], [], []>} : vector<16x32xf32>, vector<32x128xf32>, vector<16x128xf32> -> vector<16x128xf32>
    %c0_9 = arith.constant 0 : index
    %c0_10 = arith.constant 0 : index
    %10 = vector.load %arg5[%c0_9, %c0_10] : memref<16x1xf32, #tpu.memory_space<vmem>>, vector<16x1xf32>
    %11 = vector.broadcast %10 : vector<16x1xf32> to vector<16x128xf32>
    %12 = arith.addf %9, %11 : vector<16x128xf32>
    %cst_11 = arith.constant 0.000000e+00 : f32
    %13 = vector.broadcast %cst_11 : f32 to vector<16x128xf32>
    %14 = arith.maximumf %12, %13 : vector<16x128xf32>
    %c0_12 = arith.constant 0 : index
    %c0_13 = arith.constant 0 : index
    %15 = vector.load %arg6[%c0_12, %c0_13] : memref<4x16xf32, #tpu.memory_space<vmem>>, vector<4x16xf32>
    %cst_14 = arith.constant dense<0.000000e+00> : vector<4x128xf32>
    %16 = tpu.matmul %15, %14, %cst_14 {dimension_numbers = #tpu.dot_dimension_numbers<[1], [0], [0], [1], [0, 0, 1, 1], [], []>} : vector<4x16xf32>, vector<16x128xf32>, vector<4x128xf32> -> vector<4x128xf32>
    %c0_15 = arith.constant 0 : index
    %c0_16 = arith.constant 0 : index
    %17 = vector.load %arg7[%c0_15, %c0_16] : memref<4x1xf32, #tpu.memory_space<vmem>>, vector<4x1xf32>
    %18 = vector.broadcast %17 : vector<4x1xf32> to vector<4x128xf32>
    %19 = arith.addf %16, %18 : vector<4x128xf32>
    %c0_17 = arith.constant 0 : index
    %c0_18 = arith.constant 0 : index
    %20 = vector.load %arg8[%c0_17, %c0_18] : memref<4x128xf32, #tpu.memory_space<vmem>>, vector<4x128xf32>
    tpu.vector_store %arg8[%c0_17, %c0_18], %19 {strides = array<i32>} : memref<4x128xf32, #tpu.memory_space<vmem>>, vector<4x128xf32>,
    return
  }
  func.func @transform_0(%arg0: i32) -> (i32, i32) {
    %c0_i32 = arith.constant 0 : i32
    %c0_i32_0 = arith.constant 0 : i32
    return %c0_i32, %arg0 : i32, i32
  }
  func.func @transform_1(%arg0: i32) -> (i32, i32) {
    %c0_i32 = arith.constant 0 : i32
    %c0_i32_0 = arith.constant 0 : i32
    %c0_i32_1 = arith.constant 0 : i32
    return %c0_i32, %c0_i32_0 : i32, i32
  }
  func.func @transform_2(%arg0: i32) -> (i32, i32) {
    %c0_i32 = arith.constant 0 : i32
    %c0_i32_0 = arith.constant 0 : i32
    %c0_i32_1 = arith.constant 0 : i32
    return %c0_i32, %c0_i32_0 : i32, i32
  }
  func.func @transform_3(%arg0: i32) -> (i32, i32) {
    %c0_i32 = arith.constant 0 : i32
    %c0_i32_0 = arith.constant 0 : i32
    %c0_i32_1 = arith.constant 0 : i32
    return %c0_i32, %c0_i32_0 : i32, i32
  }
  func.func @transform_4(%arg0: i32) -> (i32, i32) {
    %c0_i32 = arith.constant 0 : i32
    %c0_i32_0 = arith.constant 0 : i32
    %c0_i32_1 = arith.constant 0 : i32
    return %c0_i32, %c0_i32_0 : i32, i32
  }
  func.func @transform_5(%arg0: i32) -> (i32, i32) {
    %c0_i32 = arith.constant 0 : i32
    %c0_i32_0 = arith.constant 0 : i32
    %c0_i32_1 = arith.constant 0 : i32
    return %c0_i32, %c0_i32_0 : i32, i32
  }
  func.func @transform_6(%arg0: i32) -> (i32, i32) {
    %c0_i32 = arith.constant 0 : i32
    %c0_i32_0 = arith.constant 0 : i32
    %c0_i32_1 = arith.constant 0 : i32
    return %c0_i32, %c0_i32_0 : i32, i32
  }
  func.func @transform_7(%arg0: i32) -> (i32, i32) {
    %c0_i32 = arith.constant 0 : i32
    %c0_i32_0 = arith.constant 0 : i32
    return %c0_i32, %arg0 : i32, i32
  }
}

</mosaic_0001>

<llo_original>
// kernel: _forward_natural.1
$region0: #{_forward_natural.1}
  #allocation0 [shape = 'u32[]', space=smem, size = 0x4, offset = 0x4, fixed_abs, tag = 'smem constant byte address 0x4 - core index']
  #allocation1 [shape = 'u32[144,128]{1,0:T(1,128)}', space=vmem, size = 0x12000, scoped, tag = 'internal scratch']
  %s0 = inlined_call_operand.vmem [shape: f32[8,128], index: 0, kind: input, shape index: {}]
  %s1 = inlined_call_operand.vmem [shape: f32[32,8], index: 1, kind: input, shape index: {}]
  %s2 = inlined_call_operand.vmem [shape: f32[32,1], index: 2, kind: input, shape index: {}]
  %s3 = inlined_call_operand.vmem [shape: f32[16,32], index: 3, kind: input, shape index: {}]
  %s4 = inlined_call_operand.vmem [shape: f32[16,1], index: 4, kind: input, shape index: {}]
  %s5 = inlined_call_operand.vmem [shape: f32[4,16], index: 5, kind: input, shape index: {}]
  %s6 = inlined_call_operand.vmem [shape: f32[4,1], index: 6, kind: input, shape index: {}]
  %s7 = inlined_call_operand.vmem [shape: f32[4,128], index: 7, kind: output, shape index: {}]
  %s8 = sld [smem:[#allocation0]]
  $region38: #{_forward_natural.1} parent=0
    _
  %s10 = ssub.s32 1, %s8
  %s11 = scalar_select 0, %s10, %s8
  // Predicated region
  $region2: #{_forward_natural.1} parent=0 // pred_check
    _
  $region3: #{_forward_natural.1} parent=0 // pred_check_branch
    %13 = sbr.rel (0) target = $region5
  $region4: #{_forward_natural.1} parent=0 // pred_region
    _
  $region5: #{_forward_natural.1} parent=0 // pred_fallthru
    _
  // Predicated region
  $region6: #{_forward_natural.1} parent=0 // pred_check
    _
  $region7: #{_forward_natural.1} parent=0 // pred_check_branch
    %15 = sbr.rel (0) target = $region9
  $region8: #{_forward_natural.1} parent=0 // pred_region
    _
  $region9: #{_forward_natural.1} parent=0 // pred_fallthru
    _
  // Predicated region
  $region10: #{_forward_natural.1} parent=0 // pred_check
    _
  $region11: #{_forward_natural.1} parent=0 // pred_check_branch
    %17 = sbr.rel (0) target = $region13
  $region12: #{_forward_natural.1} parent=0 // pred_region
    _
  $region13: #{_forward_natural.1} parent=0 // pred_fallthru
    _
  // Predicated region
  $region14: #{_forward_natural.1} parent=0 // pred_check
    _
  $region15: #{_forward_natural.1} parent=0 // pred_check_branch
    %19 = sbr.rel (0) target = $region17
  $region16: #{_forward_natural.1} parent=0 // pred_region
    _
  $region17: #{_forward_natural.1} parent=0 // pred_fallthru
    _
  // Predicated region
  $region18: #{_forward_natural.1} parent=0 // pred_check
    _
  $region19: #{_forward_natural.1} parent=0 // pred_check_branch
    %21 = sbr.rel (0) target = $region21
  $region20: #{_forward_natural.1} parent=0 // pred_region
    _
  $region21: #{_forward_natural.1} parent=0 // pred_fallthru
    _
  // Predicated region
  $region22: #{_forward_natural.1} parent=0 // pred_check
    _
  $region23: #{_forward_natural.1} parent=0 // pred_check_branch
    %23 = sbr.rel (0) target = $region25
  $region24: #{_forward_natural.1} parent=0 // pred_region
    _
  $region25: #{_forward_natural.1} parent=0 // pred_fallthru
    _
  // Predicated region
  $region26: #{_forward_natural.1} parent=0 // pred_check
    _
  $region27: #{_forward_natural.1} parent=0 // pred_check_branch
    %25 = sbr.rel (0) target = $region29
  $region28: #{_forward_natural.1} parent=0 // pred_region
    _
  $region29: #{_forward_natural.1} parent=0 // pred_fallthru
    _
  %v26 = vld [vmem:[%s0] sm:$0xff]
  %v27 = vld [vmem:[%s1] sm:$0xff]
  %v28 = vld [vmem:[%s1 + $0x8] sm:$0xff]
  %v29 = vld [vmem:[%s1 + $0x10] sm:$0xff]
  %v30 = vld [vmem:[%s1 + $0x18] sm:$0xff]
  %v31 = vld [vmem:[%s2] sm:$0xff]
  %v32 = vld [vmem:[%s2 + $0x8] sm:$0xff]
  %v33 = vld [vmem:[%s2 + $0x10] sm:$0xff]
  %v34 = vld [vmem:[%s2 + $0x18] sm:$0xff]
  %36 = vset.pattern.permute.xlu0 0
  %37 = vperm.xlu0 %36, %v31
  %v38 = vpop.permute.xlu0 %37
  %41 = vset.pattern.permute.xlu0 0
  %42 = vperm.xlu0 %41, %v32
  %v43 = vpop.permute.xlu0 %42
  %46 = vset.pattern.permute.xlu0 0
  %47 = vperm.xlu0 %46, %v33
  %v48 = vpop.permute.xlu0 %47
  %51 = vset.pattern.permute.xlu0 0
  %52 = vperm.xlu0 %51, %v34
  %v53 = vpop.permute.xlu0 %52
  %vm55 = vcmask 64512
  %v57 = vsel %vm55, %v27, 0
  %v60 = vsel %vm55, %v28, 0
  %v63 = vsel %vm55, %v29, 0
  %v66 = vsel %vm55, %v30, 0
  %68 = vmatprep.subr.mxu0 0.0
  %69 = vmatpush1.msra.mxu0 %v26
  %70 = vmatprep.subr.mxu0 0.0
  %71 = vmatpush1.msra.mxu0 0.0
  %72 = vmatprep.subr.mxu0 0.0
  %73 = vmatpush1.msra.mxu0 0.0
  %74 = vmatprep.subr.mxu0 0.0
  %75 = vmatpush1.msra.mxu0 0.0
  %76 = vmatprep.subr.mxu0 0.0
  %77 = vmatpush1.msra.mxu0 0.0
  %78 = vmatprep.subr.mxu0 0.0
  %79 = vmatpush1.msra.mxu0 0.0
  %80 = vmatprep.subr.mxu0 0.0
  %81 = vmatpush1.msra.mxu0 0.0
  %82 = vmatprep.subr.mxu0 0.0
  %83 = vmatpush1.msra.mxu0 0.0
  %84 = vmatprep.subr.mxu0 0.0
  %85 = vmatpush1.msra.mxu0 0.0
  %86 = vmatprep.subr.mxu0 0.0
  %87 = vmatpush1.msra.mxu0 0.0
  %88 = vmatprep.subr.mxu0 0.0
  %89 = vmatpush1.msra.mxu0 0.0
  %90 = vmatprep.subr.mxu0 0.0
  %91 = vmatpush1.msra.mxu0 0.0
  %92 = vmatprep.subr.mxu0 0.0
  %93 = vmatpush1.msra.mxu0 0.0
  %94 = vmatprep.subr.mxu0 0.0
  %95 = vmatpush1.msra.mxu0 0.0
  %96 = vmatprep.subr.mxu0 0.0
  %97 = vmatpush1.msra.mxu0 0.0
  %98 = vmatprep.subr.mxu0 0.0
  %99 = vmatpush1.msra.mxu0 0.0
  %100 = vmatprep.subr.mxu0 0.0
  %101 = vmatpush1.msra.mxu0 0.0
  %102 = vmatprep.subr.mxu0 0.0
  %103 = vmatpush1.msra.mxu0 0.0
  %104 = vmatprep.subr.mxu0 0.0
  %105 = vmatpush1.msra.mxu0 0.0
  %106 = vmatprep.subr.mxu0 0.0
  %107 = vmatpush1.msra.mxu0 0.0
  %108 = vmatprep.subr.mxu0 0.0
  %109 = vmatpush1.msra.mxu0 0.0
  %110 = vmatprep.subr.mxu0 0.0
  %111 = vmatpush1.msra.mxu0 0.0
  %112 = vmatprep.subr.mxu0 0.0
  %113 = vmatpush1.msra.mxu0 0.0
  %114 = vmatprep.subr.mxu0 0.0
  %115 = vmatpush1.msra.mxu0 0.0
  %116 = vmatprep.subr.mxu0 0.0
  %117 = vmatpush1.msra.mxu0 0.0
  %118 = vmatprep.subr.mxu0 0.0
  %119 = vmatpush1.msra.mxu0 0.0
  %120 = vmatprep.subr.mxu0 0.0
  %121 = vmatpush1.msra.mxu0 0.0
  %122 = vmatprep.subr.mxu0 0.0
  %123 = vmatpush1.msra.mxu0 0.0
  %124 = vmatprep.subr.mxu0 0.0
  %125 = vmatpush1.msra.mxu0 0.0
  %126 = vmatprep.subr.mxu0 0.0
  %127 = vmatpush1.msra.mxu0 0.0
  %128 = vmatprep.subr.mxu0 0.0
  %129 = vmatpush1.msra.mxu0 0.0
  %130 = vmatprep.subr.mxu0 0.0
  %131 = vmatpush1.msra.mxu0 0.0
  %132 = vmatprep.mubr.f32.mxu0 0.0
  %133 = vmatmul.mubr.f32.gmra.mrb[0].mxu0 %v57
  %v134 = vpop.f32.mrb[0].mxu0
  %v135 = vadd.f32 %v38, %v134
  %v136 = vpop.f32.mrb[0].mxu0
  %137 = vmatprep.mubr.f32.mxu0 0.0
  %138 = vmatmul.mubr.f32.gmra.mrb[0].mxu0 %v60
  %v139 = vpop.f32.mrb[0].mxu0
  %v140 = vadd.f32 %v43, %v139
  %v141 = vpop.f32.mrb[0].mxu0
  %142 = vmatprep.mubr.f32.mxu0 0.0
  %143 = vmatmul.mubr.f32.gmra.mrb[0].mxu0 %v63
  %v144 = vpop.f32.mrb[0].mxu0
  %v145 = vadd.f32 %v48, %v144
  %v146 = vpop.f32.mrb[0].mxu0
  %147 = vmatprep.mubr.f32.mxu0 0.0
  %148 = vmatmul.mubr.f32.gmra.mrb[0].mxu0 %v66
  %v149 = vpop.f32.mrb[0].mxu0
  %v150 = vadd.f32 %v53, %v149
  %v151 = vpop.f32.mrb[0].mxu0
  %152 = vdwg.mxu0
  %v153 = vmax.f32 %v135, 0.0
  %v154 = vmax.f32 %v140, 0.0
  %v155 = vmax.f32 %v145, 0.0
  %v156 = vmax.f32 %v150, 0.0
  %v157 = vld [vmem:[%s3] sm:$0xff]
  %v158 = vld [vmem:[%s3 + $0x8] sm:$0xff]
  %v159 = vld [vmem:[%s4] sm:$0xff]
  %v160 = vld [vmem:[%s4 + $0x8] sm:$0xff]
  %162 = vset.pattern.permute.xlu0 0
  %163 = vperm.xlu0 %162, %v159
  %v164 = vpop.permute.xlu0 %163
  %167 = vset.pattern.permute.xlu0 0
  %168 = vperm.xlu0 %167, %v160
  %v169 = vpop.permute.xlu0 %168
  %vm171 = vcmask 261120
  %v173 = vsel %vm171, %v157, 0
  %v176 = vsel %vm171, %v158, 0
  %178 = vmatprep.subr.mxu0 0.0
  %179 = vmatpush1.msra.mxu0 %v153
  %180 = vmatprep.subr.mxu0 0.0
  %181 = vmatpush1.msra.mxu0 %v154
  %182 = vmatprep.subr.mxu0 0.0
  %183 = vmatpush1.msra.mxu0 %v155
  %184 = vmatprep.subr.mxu0 0.0
  %185 = vmatpush1.msra.mxu0 %v156
  %186 = vmatprep.subr.mxu0 0.0
  %187 = vmatpush1.msra.mxu0 0.0
  %188 = vmatprep.subr.mxu0 0.0
  %189 = vmatpush1.msra.mxu0 0.0
  %190 = vmatprep.subr.mxu0 0.0
  %191 = vmatpush1.msra.mxu0 0.0
  %192 = vmatprep.subr.mxu0 0.0
  %193 = vmatpush1.msra.mxu0 0.0
  %194 = vmatprep.subr.mxu0 0.0
  %195 = vmatpush1.msra.mxu0 0.0
  %196 = vmatprep.subr.mxu0 0.0
  %197 = vmatpush1.msra.mxu0 0.0
  %198 = vmatprep.subr.mxu0 0.0
  %199 = vmatpush1.msra.mxu0 0.0
  %200 = vmatprep.subr.mxu0 0.0
  %201 = vmatpush1.msra.mxu0 0.0
  %202 = vmatprep.subr.mxu0 0.0
  %203 = vmatpush1.msra.mxu0 0.0
  %204 = vmatprep.subr.mxu0 0.0
  %205 = vmatpush1.msra.mxu0 0.0
  %206 = vmatprep.subr.mxu0 0.0
  %207 = vmatpush1.msra.mxu0 0.0
  %208 = vmatprep.subr.mxu0 0.0
  %209 = vmatpush1.msra.mxu0 0.0
  %210 = vmatprep.subr.mxu0 0.0
  %211 = vmatpush1.msra.mxu0 0.0
  %212 = vmatprep.subr.mxu0 0.0
  %213 = vmatpush1.msra.mxu0 0.0
  %214 = vmatprep.subr.mxu0 0.0
  %215 = vmatpush1.msra.mxu0 0.0
  %216 = vmatprep.subr.mxu0 0.0
  %217 = vmatpush1.msra.mxu0 0.0
  %218 = vmatprep.subr.mxu0 0.0
  %219 = vmatpush1.msra.mxu0 0.0
  %220 = vmatprep.subr.mxu0 0.0
  %221 = vmatpush1.msra.mxu0 0.0
  %222 = vmatprep.subr.mxu0 0.0
  %223 = vmatpush1.msra.mxu0 0.0
  %224 = vmatprep.subr.mxu0 0.0
  %225 = vmatpush1.msra.mxu0 0.0
  %226 = vmatprep.subr.mxu0 0.0
  %227 = vmatpush1.msra.mxu0 0.0
  %228 = vmatprep.subr.mxu0 0.0
  %229 = vmatpush1.msra.mxu0 0.0
  %230 = vmatprep.subr.mxu0 0.0
  %231 = vmatpush1.msra.mxu0 0.0
  %232 = vmatprep.subr.mxu0 0.0
  %233 = vmatpush1.msra.mxu0 0.0
  %234 = vmatprep.subr.mxu0 0.0
  %235 = vmatpush1.msra.mxu0 0.0
  %236 = vmatprep.subr.mxu0 0.0
  %237 = vmatpush1.msra.mxu0 0.0
  %238 = vmatprep.subr.mxu0 0.0
  %239 = vmatpush1.msra.mxu0 0.0
  %240 = vmatprep.subr.mxu0 0.0
  %241 = vmatpush1.msra.mxu0 0.0
  %242 = vmatprep.mubr.f32.mxu0 0.0
  %243 = vmatmul.mubr.f32.gmra.mrb[0].mxu0 %v173
  %v244 = vpop.f32.mrb[0].mxu0
  %v245 = vadd.f32 %v164, %v244
  %v246 = vpop.f32.mrb[0].mxu0
  %247 = vmatprep.mubr.f32.mxu0 0.0
  %248 = vmatmul.mubr.f32.gmra.mrb[0].mxu0 %v176
  %v249 = vpop.f32.mrb[0].mxu0
  %v250 = vadd.f32 %v169, %v249
  %v251 = vpop.f32.mrb[0].mxu0
  %252 = vdwg.mxu0
  %v253 = vmax.f32 %v245, 0.0
  %v254 = vmax.f32 %v250, 0.0
  %v255 = vld [vmem:[%s5] sm:$0xf]
  %v256 = vld [vmem:[%s6] sm:$0xf]
  %258 = vset.pattern.permute.xlu0 0
  %259 = vperm.xlu0 %258, %v256
  %v260 = vpop.permute.xlu0 %259
  %vm262 = vcmask 130048
  %v264 = vsel %vm262, %v255, 0
  %266 = vmatprep.subr.mxu0 0.0
  %267 = vmatpush1.msra.mxu0 %v253
  %268 = vmatprep.subr.mxu0 0.0
  %269 = vmatpush1.msra.mxu0 %v254
  %270 = vmatprep.subr.mxu0 0.0
  %271 = vmatpush1.msra.mxu0 0.0
  %272 = vmatprep.subr.mxu0 0.0
  %273 = vmatpush1.msra.mxu0 0.0
  %274 = vmatprep.subr.mxu0 0.0
  %275 = vmatpush1.msra.mxu0 0.0
  %276 = vmatprep.subr.mxu0 0.0
  %277 = vmatpush1.msra.mxu0 0.0
  %278 = vmatprep.subr.mxu0 0.0
  %279 = vmatpush1.msra.mxu0 0.0
  %280 = vmatprep.subr.mxu0 0.0
  %281 = vmatpush1.msra.mxu0 0.0
  %282 = vmatprep.subr.mxu0 0.0
  %283 = vmatpush1.msra.mxu0 0.0
  %284 = vmatprep.subr.mxu0 0.0
  %285 = vmatpush1.msra.mxu0 0.0
  %286 = vmatprep.subr.mxu0 0.0
  %287 = vmatpush1.msra.mxu0 0.0
  %288 = vmatprep.subr.mxu0 0.0
  %289 = vmatpush1.msra.mxu0 0.0
  %290 = vmatprep.subr.mxu0 0.0
  %291 = vmatpush1.msra.mxu0 0.0
  %292 = vmatprep.subr.mxu0 0.0
  %293 = vmatpush1.msra.mxu0 0.0
  %294 = vmatprep.subr.mxu0 0.0
  %295 = vmatpush1.msra.mxu0 0.0
  %296 = vmatprep.subr.mxu0 0.0
  %297 = vmatpush1.msra.mxu0 0.0
  %298 = vmatprep.subr.mxu0 0.0
  %299 = vmatpush1.msra.mxu0 0.0
  %300 = vmatprep.subr.mxu0 0.0
  %301 = vmatpush1.msra.mxu0 0.0
  %302 = vmatprep.subr.mxu0 0.0
  %303 = vmatpush1.msra.mxu0 0.0
  %304 = vmatprep.subr.mxu0 0.0
  %305 = vmatpush1.msra.mxu0 0.0
  %306 = vmatprep.subr.mxu0 0.0
  %307 = vmatpush1.msra.mxu0 0.0
  %308 = vmatprep.subr.mxu0 0.0
  %309 = vmatpush1.msra.mxu0 0.0
  %310 = vmatprep.subr.mxu0 0.0
  %311 = vmatpush1.msra.mxu0 0.0
  %312 = vmatprep.subr.mxu0 0.0
  %313 = vmatpush1.msra.mxu0 0.0
  %314 = vmatprep.subr.mxu0 0.0
  %315 = vmatpush1.msra.mxu0 0.0
  %316 = vmatprep.subr.mxu0 0.0
  %317 = vmatpush1.msra.mxu0 0.0
  %318 = vmatprep.subr.mxu0 0.0
  %319 = vmatpush1.msra.mxu0 0.0
  %320 = vmatprep.subr.mxu0 0.0
  %321 = vmatpush1.msra.mxu0 0.0
  %322 = vmatprep.subr.mxu0 0.0
  %323 = vmatpush1.msra.mxu0 0.0
  %324 = vmatprep.subr.mxu0 0.0
  %325 = vmatpush1.msra.mxu0 0.0
  %326 = vmatprep.subr.mxu0 0.0
  %327 = vmatpush1.msra.mxu0 0.0
  %328 = vmatprep.subr.mxu0 0.0
  %329 = vmatpush1.msra.mxu0 0.0
  %330 = vmatprep.mubr.f32.mxu0 0.0
  %331 = vmatmul.mubr.f32.gmra.mrb[0].mxu0 %v264
  %v332 = vpop.f32.mrb[0].mxu0
  %v333 = vadd.f32 %v260, %v332
  %v334 = vpop.f32.mrb[0].mxu0
  %335 = vdwg.mxu0
  %336 = vst [vmem:[%s7] sm:$0xf] %v333
  // Predicated region
  $region30: #{_forward_natural.1} parent=0 // pred_check
    _
  $region31: #{_forward_natural.1} parent=0 // pred_check_branch
    %338 = sbr.rel (0) target = $region33
  $region32: #{_forward_natural.1} parent=0 // pred_region
    _
  $region33: #{_forward_natural.1} parent=0 // pred_fallthru
    _
  // Predicated region
  $region34: #{_forward_natural.1} parent=0 // pred_check
    _
  $region35: #{_forward_natural.1} parent=0 // pred_check_branch
    %340 = sbr.rel (0) target = $region37
  $region36: #{_forward_natural.1} parent=0 // pred_region
    _
  $region37: #{_forward_natural.1} parent=0 // pred_fallthru
    _

</llo_original>
